<compile_context>
chip_gen: v5e
topology: v5e:2x2
jax: 0.10.0
libtpu: 0.0.40
codegen_flags: <defaults>
</compile_context>

<pallas_src>
import functools
import math

import jax
import jax.numpy as jnp
from jax.experimental import pallas as pl
from jax.experimental.pallas import tpu as pltpu


def _round_up(x, m):
    return ((x + m - 1) // m) * m


def _step_footprint(tm, tn, d_in_p, cd_size, out_size):
    """Double-buffered per-step VMEM footprint (bytes)."""
    return 2 * ((tm + tn) * d_in_p * cd_size      # x tile + weight tile
                + tm * tn * out_size              # output tile
                + tn * 4 + tm * 4)                # bias + row weights (f32)


def _pick_col_tile(d_out_p, d_in_p, tm, cd_size, out_size, budget_bytes):
    """Largest multiple of 128 dividing d_out_p that fits the VMEM budget."""
    best = 128
    for tn in range(128, d_out_p + 1, 128):
        if d_out_p % tn:
            continue
        if _step_footprint(tm, tn, d_in_p, cd_size, out_size) <= budget_bytes:
            best = tn
    return best


def _vmem_budget():
    """Generation-aware VMEM budget (leave headroom; works on 64 MiB v7x)."""
    try:
        cap = pltpu.get_tpu_info().vmem_capacity_bytes
    except Exception:
        cap = 64 * 1024 * 1024
    return max(32 * 1024 * 1024, min(int(0.75 * cap), 100 * 1024 * 1024))


# ----------------------------------------------------------------------------
# Pallas kernel: one (row_tile, col_tile) of the grouped expert matmul.
# ----------------------------------------------------------------------------
def grouped_expert_kernel(gid_ref, cnt_ref, x_ref, w_ref, b_ref, rw_ref, o_ref):
    # gid_ref: (num_row_tiles,) int32 SMEM  - expert id per row tile (index_maps)
    # cnt_ref: (num_row_tiles,) int32 SMEM  - valid rows per row tile
    # x_ref:   (tm, d_in_p)     rows routed to expert gid_ref[i] (zero padded)
    # w_ref:   (1, tn, d_in_p)  expert weight tile (nn.Linear layout)
    # b_ref:   (1, 1, tn)       expert bias tile (f32)
    # rw_ref:  (tm, 1)          routing weight per row (f32, 0 for padding)
    # o_ref:   (tm, tn)         written exactly once
    del gid_ref
    i = pl.program_id(1)

    @pl.when(cnt_ref[i] > 0)
    def _():
        acc = jax.lax.dot_general(
            x_ref[...], w_ref[0],
            dimension_numbers=(((1,), (1,)), ((), ())),   # contract on d_in
            preferred_element_type=jnp.float32)
        o_ref[...] = (rw_ref[...] * (acc + b_ref[0])).astype(o_ref.dtype)

    @pl.when(cnt_ref[i] == 0)
    def _():  # fully-padded tail tile: skip the matmul, just define the output
        o_ref[...] = jnp.zeros_like(o_ref)


# ----------------------------------------------------------------------------
# Wrapper: routing, padded-row gather, Pallas grouped matmul, combine, aux loss
# ----------------------------------------------------------------------------
def moe_forward(x, gate_w, expert_w, expert_b, k=2, *,
                block_rows=128, compute_dtype=jnp.bfloat16):
    """x: (..., d_in); gate_w: (E, d_in); expert_w: (E, d_out, d_in);
    expert_b: (E, d_out).  Returns (out_f32, aux_loss)."""
    batch_shape = x.shape[:-1]
    d_in = x.shape[-1]
    E, d_out, _ = expert_w.shape
    k = min(k, E)
    T = math.prod(batch_shape)
    xf = x.reshape(T, d_in)

    # ---- gate + top-k routing (tiny, control-flow heavy -> plain XLA) ----
    gate_logits = xf.astype(jnp.float32) @ gate_w.astype(jnp.float32).T  # (T,E)
    top_k_vals, selected_experts = jax.lax.top_k(gate_logits, k)
    top_k_weights = jax.nn.softmax(top_k_vals, axis=-1)                  # f32

    # ---- auxiliary load-balancing loss (torch side effect; returned here) ----
    probs = jax.nn.softmax(gate_logits, axis=1)
    rows = jnp.arange(T)[:, None]
    gates_full = jnp.zeros((T, E), jnp.float32).at[rows, selected_experts].set(
        top_k_weights)
    probs_sum = probs.sum(0)
    freq = (gates_full > 0).astype(jnp.float32).sum(0)
    lsesq = (jax.scipy.special.logsumexp(gate_logits, axis=-1) ** 2).sum()
    eps = 1e-12  # F.normalize(p=1) epsilon
    p_n = probs_sum / jnp.maximum(jnp.abs(probs_sum).sum(), eps)
    f_n = freq / jnp.maximum(jnp.abs(freq).sum(), eps)
    aux_loss = E * (p_n * f_n).sum() + 0.1 * lsesq / T
    # TODO(synk): eval-mode ppl / agg_ppl host-side .item() attribute stats on
    # the gate weight are not reproduced.

    # ---- sort routed (token, expert) pairs by expert ----
    tm = int(block_rows)
    assert tm % 8 == 0, "block_rows must be a multiple of 8 (sublane)"
    flat_experts = selected_experts.reshape(-1).astype(jnp.int32)        # (T*k,)
    sort_idx = jnp.argsort(flat_experts)
    sorted_experts = flat_experts[sort_idx]
    token_idx = (sort_idx // k).astype(jnp.int32)                        # (T*k,)
    row_weights = top_k_weights.reshape(-1)[sort_idx]                    # f32

    group_sizes = jnp.bincount(flat_experts, length=E).astype(jnp.int32)
    group_starts = jnp.cumsum(group_sizes) - group_sizes
    padded_sizes = ((group_sizes + tm - 1) // tm) * tm   # tile-aligned groups
    padded_ends = jnp.cumsum(padded_sizes)
    padded_starts = padded_ends - padded_sizes

    # Static upper bound on total tile-aligned padded rows.
    P = _round_up(T * k + E * (tm - 1), tm)
    num_row_tiles = P // tm
    dest = (padded_starts[sorted_experts] +
            (jnp.arange(T * k, dtype=jnp.int32) -
             group_starts[sorted_experts])).astype(jnp.int32)

    # Per row-tile expert id + valid-row count (scalar-prefetched into SMEM).
    tile_starts = jnp.arange(num_row_tiles, dtype=jnp.int32) * tm
    tile_gid = jnp.minimum(
        jnp.searchsorted(padded_ends, tile_starts, side="right"),
        E - 1).astype(jnp.int32)

    # Per padded row: source token (sentinel T -> zero row) and routing weight.
    # Only tiny int/f32 scatters here; the big (P, d_in) buffer is a GATHER.
    row_token = jnp.full((P,), T, jnp.int32).at[dest].set(token_idx)
    rw = jnp.zeros((P,), jnp.float32).at[dest].set(row_weights).reshape(P, 1)
    tile_cnt = (row_token < T).astype(jnp.int32).reshape(
        num_row_tiles, tm).sum(axis=1).astype(jnp.int32)

    # ---- pad feature dims to lane-dense multiples of 128; bf16 compute ----
    d_in_p = _round_up(d_in, 128)
    d_out_p = _round_up(d_out, 128)
    cdtype = jnp.dtype(compute_dtype)
    cd_size = cdtype.itemsize
    out_size = cd_size

    xf_p = jnp.pad(xf, ((0, 0), (0, d_in_p - d_in))).astype(cdtype)
    xf_ext = jnp.concatenate([xf_p, jnp.zeros((1, d_in_p), cdtype)], axis=0)
    xs = xf_ext[row_token]                                   # gather, no scatter
    w_p = jnp.pad(expert_w,
                  ((0, 0), (0, d_out_p - d_out), (0, d_in_p - d_in))
                  ).astype(cdtype)
    b_p = jnp.pad(expert_b, ((0, 0), (0, d_out_p - d_out))
                  ).astype(jnp.float32).reshape(E, 1, d_out_p)

    # ---- generation-aware tile / VMEM sizing ----
    budget = _vmem_budget()
    tn = _pick_col_tile(d_out_p, d_in_p, tm, cd_size, out_size, budget)
    num_col_tiles = d_out_p // tn
    footprint = _step_footprint(tm, tn, d_in_p, cd_size, out_size)
    vmem_limit = int(max(32 * 1024 * 1024, min(budget, 2 * footprint)))

    y = pl.pallas_call(
        grouped_expert_kernel,
        out_shape=jax.ShapeDtypeStruct((P, d_out_p), cdtype),
        grid_spec=pltpu.PrefetchScalarGridSpec(
            num_scalar_prefetch=2,
            # col tiles outer / row tiles inner: consecutive row tiles of the
            # same expert keep the weight tile resident (no re-DMA).
            grid=(num_col_tiles, num_row_tiles),
            in_specs=[
                pl.BlockSpec((tm, d_in_p), lambda j, i, gids, cnts: (i, 0)),
                pl.BlockSpec((1, tn, d_in_p),
                             lambda j, i, gids, cnts: (gids[i], j, 0)),
                pl.BlockSpec((1, 1, tn),
                             lambda j, i, gids, cnts: (gids[i], 0, j)),
                pl.BlockSpec((tm, 1), lambda j, i, gids, cnts: (i, 0)),
            ],
            out_specs=pl.BlockSpec((tm, tn), lambda j, i, gids, cnts: (i, j)),
        ),
        compiler_params=pltpu.CompilerParams(
            # Each output tile is written exactly once -> both axes parallel
            # (lets v7x megacore split the grid; no-op on single-TC chips).
            dimension_semantics=("parallel", "parallel"),
            vmem_limit_bytes=vmem_limit,
        ),
    )(tile_gid, tile_cnt, xs, w_p, b_p, rw)                  # (P, d_out_p)

    # ---- combine: pure gather + sum over k (weights already applied) ----
    pair_rows = jnp.zeros((T * k,), jnp.int32).at[sort_idx].set(dest)
    pair_rows = pair_rows.reshape(T, k)
    y_pairs = y[pair_rows][:, :, :d_out].astype(jnp.float32)  # (T, k, d_out)
    out = y_pairs.sum(axis=1)
    return out.reshape(*batch_shape, d_out), aux_loss


# ----------------------------------------------------------------------------
# Reference (pure JAX, dense) for a correctness check
# ----------------------------------------------------------------------------
def moe_forward_ref(x, gate_w, expert_w, expert_b, k=2):
    batch_shape = x.shape[:-1]
    xf = x.reshape(-1, x.shape[-1]).astype(jnp.float32)
    logits = xf @ gate_w.T
    vals, idx = jax.lax.top_k(logits, k)
    w = jax.nn.softmax(vals, axis=-1)
    E, d_out, _ = expert_w.shape
    all_out = jnp.einsum("td,eod->teo", xf, expert_w) + expert_b[None]
    rows = jnp.arange(xf.shape[0])[:, None]
    gates = jnp.zeros((xf.shape[0], E)).at[rows, idx].set(w)
    out = jnp.einsum("te,teo->to", gates, all_out)
    return out.reshape(*batch_shape, d_out)


if __name__ == "__main__":
    key = jax.random.PRNGKey(0)
    k_x, k_g, k_w, k_b = jax.random.split(key, 4)

    batch, seq = 2, 8
    in_features, out_features = 32, 32
    num_experts, topk = 4, 2

    x = jax.random.normal(k_x, (batch, seq, in_features), jnp.float32)
    gate_w = 0.1 * jax.random.normal(k_g, (num_experts, in_features),
                                     jnp.float32)
    expert_w = 0.1 * jax.random.normal(
        k_w, (num_experts, out_features, in_features), jnp.float32)
    expert_b = 0.1 * jax.random.normal(k_b, (num_experts, out_features),
                                       jnp.float32)

    ref = moe_forward_ref(x, gate_w, expert_w, expert_b, k=topk)

    # Default bf16 MXU path (looser tolerance vs. the f32 reference).
    fwd_bf16 = jax.jit(functools.partial(moe_forward, k=topk))
    out_bf16, aux_loss = fwd_bf16(x, gate_w, expert_w, expert_b)
    out_bf16 = jax.block_until_ready(out_bf16)
    aux_loss = jax.block_until_ready(aux_loss)
    assert out_bf16.shape == (batch, seq, out_features)
    assert jnp.allclose(out_bf16, ref, atol=5e-2, rtol=5e-2), \
        "bf16 kernel mismatch vs reference"
    assert bool(jnp.isfinite(aux_loss))

    # f32 compute path for tight numerical parity.
    fwd_f32 = jax.jit(functools.partial(moe_forward, k=topk,
                                        compute_dtype=jnp.float32))
    out_f32, _ = fwd_f32(x, gate_w, expert_w, expert_b)
    out_f32 = jax.block_until_ready(out_f32)
    assert jnp.allclose(out_f32, ref, atol=1e-4, rtol=1e-4), \
        "f32 kernel mismatch vs reference"

    print("KERNEL_OK")
</pallas_src>

<mosaic_0001>
module attributes {stable_mosaic.version = 11 : i64} {
  func.func @grouped_expert_kernel(%arg0: i32, %arg1: i32, %arg2: memref<5xi32, #tpu.memory_space<smem>>, %arg3: memref<5xi32, #tpu.memory_space<smem>>, %arg4: memref<128x128xbf16, #tpu.memory_space<vmem>>, %arg5: memref<1x128x128xbf16, #tpu.memory_space<vmem>>, %arg6: memref<1x1x128xf32, #tpu.memory_space<vmem>>, %arg7: memref<128x1xf32, #tpu.memory_space<vmem>>, %arg8: memref<128x128xbf16, #tpu.memory_space<vmem>>) attributes {dimension_semantics = [#tpu.dimension_semantics<parallel>, #tpu.dimension_semantics<parallel>], iteration_bounds = array<i64: 1, 5>, scalar_prefetch = 2 : i64, scratch_operands = 0 : i64, tpu.core_type = #tpu.core_type<tc>, window_params = [{transform_indices = @transform_0, window_bounds = array<i64: 128, 128>}, {transform_indices = @transform_1, window_bounds = array<i64: 1, 128, 128>}, {transform_indices = @transform_2, window_bounds = array<i64: 1, 1, 128>}, {transform_indices = @transform_3, window_bounds = array<i64: 128, 1>}, {transform_indices = @transform_4, window_bounds = array<i64: 128, 128>}]} {
    %0 = arith.index_cast %arg1 : i32 to index
    %1 = memref.load %arg3[%0] : memref<5xi32, #tpu.memory_space<smem>>
    %c0_i32 = arith.constant 0 : i32
    %2 = arith.cmpi sgt, %1, %c0_i32 : i32
    %3 = arith.extui %2 : i1 to i32
    %c0_i32_0 = arith.constant 0 : i32
    %4 = arith.cmpi ne, %3, %c0_i32_0 : i32
    scf.if %4 {
      %c0 = arith.constant 0 : index
      %c0_3 = arith.constant 0 : index
      %10 = vector.load %arg4[%c0, %c0_3] : memref<128x128xbf16, #tpu.memory_space<vmem>>, vector<128x128xbf16>
      %c0_4 = arith.constant 0 : index
      %c0_5 = arith.constant 0 : index
      %c0_6 = arith.constant 0 : index
      %11 = vector.load %arg5[%c0_4, %c0_5, %c0_6] : memref<1x128x128xbf16, #tpu.memory_space<vmem>>, vector<1x128x128xbf16>
      %12 = vector.shape_cast %11 : vector<1x128x128xbf16> to vector<128x128xbf16>
      %cst = arith.constant dense<0.000000e+00> : vector<128x128xf32>
      %13 = tpu.matmul %10, %12, %cst {dimension_numbers = #tpu.dot_dimension_numbers<[1], [1], [0], [0], [0, 0, 1, 0], [], []>} : vector<128x128xbf16>, vector<128x128xbf16>, vector<128x128xf32> -> vector<128x128xf32>
      %c0_7 = arith.constant 0 : index
      %c0_8 = arith.constant 0 : index
      %14 = vector.load %arg7[%c0_7, %c0_8] : memref<128x1xf32, #tpu.memory_space<vmem>>, vector<128x1xf32>
      %c0_9 = arith.constant 0 : index
      %c0_10 = arith.constant 0 : index
      %c0_11 = arith.constant 0 : index
      %15 = vector.load %arg6[%c0_9, %c0_10, %c0_11] : memref<1x1x128xf32, #tpu.memory_space<vmem>>, vector<1x1x128xf32>
      %16 = vector.shape_cast %15 : vector<1x1x128xf32> to vector<1x128xf32>
      %17 = vector.broadcast %16 : vector<1x128xf32> to vector<128x128xf32>
      %18 = arith.addf %13, %17 : vector<128x128xf32>
      %19 = vector.broadcast %14 : vector<128x1xf32> to vector<128x128xf32>
      %20 = arith.mulf %19, %18 : vector<128x128xf32>
      %21 = arith.truncf %20 : vector<128x128xf32> to vector<128x128xbf16>
      %c0_12 = arith.constant 0 : index
      %c0_13 = arith.constant 0 : index
      %22 = vector.load %arg8[%c0_12, %c0_13] : memref<128x128xbf16, #tpu.memory_space<vmem>>, vector<128x128xbf16>
      tpu.vector_store %arg8[%c0_12, %c0_13], %21 {strides = array<i32>} : memref<128x128xbf16, #tpu.memory_space<vmem>>, vector<128x128xbf16>,
    } else {
    }
    %5 = arith.index_cast %arg1 : i32 to index
    %6 = memref.load %arg3[%5] : memref<5xi32, #tpu.memory_space<smem>>
    %c0_i32_1 = arith.constant 0 : i32
    %7 = arith.cmpi eq, %6, %c0_i32_1 : i32
    %8 = arith.extui %7 : i1 to i32
    %c0_i32_2 = arith.constant 0 : i32
    %9 = arith.cmpi ne, %8, %c0_i32_2 : i32
    scf.if %9 {
      %cst = arith.constant 0.000000e+00 : bf16
      %10 = vector.broadcast %cst : bf16 to vector<128x128xbf16>
      %c0 = arith.constant 0 : index
      %c0_3 = arith.constant 0 : index
      %11 = vector.load %arg8[%c0, %c0_3] : memref<128x128xbf16, #tpu.memory_space<vmem>>, vector<128x128xbf16>
      tpu.vector_store %arg8[%c0, %c0_3], %10 {strides = array<i32>} : memref<128x128xbf16, #tpu.memory_space<vmem>>, vector<128x128xbf16>,
    } else {
    }
    return
  }
  func.func @transform_0(%arg0: i32, %arg1: i32, %arg2: memref<5xi32, #tpu.memory_space<smem>>, %arg3: memref<5xi32, #tpu.memory_space<smem>>) -> (i32, i32) {
    %c0_i32 = arith.constant 0 : i32
    %c0_i32_0 = arith.constant 0 : i32
    return %arg1, %c0_i32 : i32, i32
  }
  func.func @transform_1(%arg0: i32, %arg1: i32, %arg2: memref<5xi32, #tpu.memory_space<smem>>, %arg3: memref<5xi32, #tpu.memory_space<smem>>) -> (i32, i32, i32) {
    %0 = arith.index_cast %arg1 : i32 to index
    %1 = memref.load %arg2[%0] : memref<5xi32, #tpu.memory_space<smem>>
    %c0_i32 = arith.constant 0 : i32
    %c0_i32_0 = arith.constant 0 : i32
    return %1, %arg0, %c0_i32 : i32, i32, i32
  }
  func.func @transform_2(%arg0: i32, %arg1: i32, %arg2: memref<5xi32, #tpu.memory_space<smem>>, %arg3: memref<5xi32, #tpu.memory_space<smem>>) -> (i32, i32, i32) {
    %0 = arith.index_cast %arg1 : i32 to index
    %1 = memref.load %arg2[%0] : memref<5xi32, #tpu.memory_space<smem>>
    %c0_i32 = arith.constant 0 : i32
    %c0_i32_0 = arith.constant 0 : i32
    return %1, %c0_i32, %arg0 : i32, i32, i32
  }
  func.func @transform_3(%arg0: i32, %arg1: i32, %arg2: memref<5xi32, #tpu.memory_space<smem>>, %arg3: memref<5xi32, #tpu.memory_space<smem>>) -> (i32, i32) {
    %c0_i32 = arith.constant 0 : i32
    %c0_i32_0 = arith.constant 0 : i32
    return %arg1, %c0_i32 : i32, i32
  }
  func.func @transform_4(%arg0: i32, %arg1: i32, %arg2: memref<5xi32, #tpu.memory_space<smem>>, %arg3: memref<5xi32, #tpu.memory_space<smem>>) -> (i32, i32) {
    %c0_i32 = arith.constant 0 : i32
    return %arg1, %arg0 : i32, i32
  }
}

</mosaic_0001>

<llo_original>
// kernel: custom-call.3
$region0: #{custom-call.3}
  %s0 = inlined_call_operand.vmem [shape: u32[5], index: 0, kind: output, shape index: {}]

// kernel: moe_forward.1
$region0: #{moe_forward.1}
  #allocation0 [shape = 'u32[]', space=smem, size = 0x4, offset = 0x4, fixed_abs, tag = 'smem constant byte address 0x4 - core index']
  #allocation1 [shape = 'u32[72,128]{1,0:T(1,128)}', space=vmem, size = 0x9000, scoped, tag = 'internal scratch']
  #allocation2 [shape = 's32[1]{0}', space=sflag, size = 0x4, scoped, tag = 'scoped memory for moe_forward.1']
  #allocation3 [shape = 'u8[512]{0}', space=smem, size = 0x200, scoped, tag = 'prefetched SMEM operand 0']
  #allocation4 [shape = 'u8[512]{0}', space=smem, size = 0x200, scoped, tag = 'prefetched SMEM operand 1']
  %s0 = inlined_call_operand.vmem [shape: s32[5], index: 0, kind: input, shape index: {}]
  %s1 = inlined_call_operand.vmem [shape: s32[5], index: 1, kind: input, shape index: {}]
  %s2 = inlined_call_operand.vmem [shape: bf16[640,128], index: 2, kind: input, shape index: {}]
  %s3 = inlined_call_operand.vmem [shape: bf16[4,128,128], index: 3, kind: input, shape index: {}]
  %s4 = inlined_call_operand.vmem [shape: f32[4,1,128], index: 4, kind: input, shape index: {}]
  %s5 = inlined_call_operand.vmem [shape: f32[640,1], index: 5, kind: input, shape index: {}]
  %s6 = inlined_call_operand.vmem [shape: bf16[640,128], index: 6, kind: output, shape index: {}]
  %s7 = sld [smem:[#allocation0]]
  $region57: #{moe_forward.1} parent=0
    _
  %s9 = ssub.s32 1, %s7
  %s10 = scalar_select 0, %s9, %s7
  %s12 = sshll.u32 %s0, 4
  %s13 = int_to_ptr.vmem [resolvable:$true] %s12
  %15 = dma.vmem_to_smem %s13, 16, [#allocation3], [#allocation2]
  %s17 = sshll.u32 %s1, 4
  %s18 = int_to_ptr.vmem [resolvable:$true] %s17
  %20 = dma.vmem_to_smem %s18, 16, [#allocation4], [#allocation2]
  %22 = dma.done [#allocation2], 32
  %23 = sfence
  loop: start=0, step=1, limit=7
  $region2: #{moe_forward.1} parent=0 // loop_pre_header
    _
  $region3: #{moe_forward.1} parent=0 // loop_header
    %s25 = sphi 0, %s29
    %p26 = scmp.ge.s32.totalorder %s25, 7
    %s32 = sphi 0, %s44
    %s33 = sphi 0, %s40
    %s34 = sphi 0, %s32
    %s35 = sphi 0, %s33
    %s36 = sphi 0, %s34
    %s37 = sphi 0, %s35
    %s47 = sphi 0, %s49
    %s50 = sphi 0, %s47
    %s51 = sphi 0, %s50
    %s67 = sphi 0, %s51
    %s77 = sphi 0, %s79
    %s80 = sphi 0, %s77
    %s81 = sphi 0, %s80
    %s97 = sphi 0, %s81
    %s107 = sphi 0, %s109
    %s110 = sphi 0, %s107
    %s111 = sphi 0, %s110
    %s127 = sphi 0, %s111
    %s133 = sphi 0, %s135
    %s136 = sphi 0, %s133
    %s137 = sphi 0, %s136
    %s153 = sphi 0, %s137
    %s161 = sphi 0, %s163
    %s164 = sphi 0, %s161
    %s165 = sphi 0, %s164
    %s181 = sphi 0, %s165
  $region4: #{moe_forward.1} parent=0 // loop_header_branch
    %28 = sbr.rel (%p26) target = $region8
  $region5: #{moe_forward.1} parent=0 // loop_body
    %s30 = ssub.s32 %s25, 1
    %s31 = ssub.s32 %s25, 2
    %s38 = sadd.s32 1, %s33
    %p39 = scmp.ge.s32.totalorder %s38, 5
    %s40 = scalar_select %p39, 0, %s38
    %s41 = sadd.s32 1, %s32
    %s42 = scalar_select %p39, %s41, %s32
    %p43 = scmp.ge.s32.totalorder %s42, 1
    %s44 = scalar_select %p43, 0, %s42
    %s45 = ssub.s32 %s33, %s40
    %p46 = scmp.eq.s32.totalorder %s45, 0
    %s48 = sadd.s32 %s47, 1
    %s49 = scalar_select %p46, %s47, %s48
    %p52 = pneg %p46
    %p53 = scmp.eq.s32.totalorder %s25, 4
    %p54 = por %p52, %p53
    %p55 = scmp.ne.s32.totalorder %s47, %s50
    %p56 = scmp.eq.s32.totalorder %s25, 0
    %p57 = por %p55, %p56
    %p58 = scmp.ne.s32.totalorder %s47, %s50
    %p59 = scmp.eq.s32.totalorder %s30, 4
    %p60 = por %p58, %p59
    %p61 = scmp.ne.s32.totalorder %s50, %s51
    %p62 = scmp.eq.s32.totalorder %s30, 0
    %p63 = por %p61, %p62
    %p64 = scmp.ne.s32.totalorder %s50, %s51
    %p65 = scmp.eq.s32.totalorder %s31, 4
    %p66 = por %p64, %p65
    %p68 = scmp.ne.s32.totalorder %s51, %s67
    %p69 = scmp.eq.s32.totalorder %s31, 0
    %p70 = por %p68, %p69
    %s71 = sld [smem:[#allocation3 + %s33]]
    %s72 = sld [smem:[#allocation3 + %s40]]
    %s73 = ssub.s32 %s71, %s72
    %s74 = ssub.s32 %s32, %s44
    %s75 = sor.u32 %s73, %s74
    %p76 = scmp.eq.s32.totalorder %s75, 0
    %s78 = sadd.s32 %s77, 1
    %s79 = scalar_select %p76, %s77, %s78
    %p82 = pneg %p76
    %p83 = scmp.eq.s32.totalorder %s25, 4
    %p84 = por %p82, %p83
    %p85 = scmp.ne.s32.totalorder %s77, %s80
    %p86 = scmp.eq.s32.totalorder %s25, 0
    %p87 = por %p85, %p86
    %p88 = scmp.ne.s32.totalorder %s77, %s80
    %p89 = scmp.eq.s32.totalorder %s30, 4
    %p90 = por %p88, %p89
    %p91 = scmp.ne.s32.totalorder %s80, %s81
    %p92 = scmp.eq.s32.totalorder %s30, 0
    %p93 = por %p91, %p92
    %p94 = scmp.ne.s32.totalorder %s80, %s81
    %p95 = scmp.eq.s32.totalorder %s31, 4
    %p96 = por %p94, %p95
    %p98 = scmp.ne.s32.totalorder %s81, %s97
    %p99 = scmp.eq.s32.totalorder %s31, 0
    %p100 = por %p98, %p99
    %s101 = sld [smem:[#allocation3 + %s33]]
    %s102 = sld [smem:[#allocation3 + %s40]]
    %s103 = ssub.s32 %s101, %s102
    %s104 = ssub.s32 %s32, %s44
    %s105 = sor.u32 %s103, %s104
    %p106 = scmp.eq.s32.totalorder %s105, 0
    %s108 = sadd.s32 %s107, 1
    %s109 = scalar_select %p106, %s107, %s108
    %p112 = pneg %p106
    %p113 = scmp.eq.s32.totalorder %s25, 4
    %p114 = por %p112, %p113
    %p115 = scmp.ne.s32.totalorder %s107, %s110
    %p116 = scmp.eq.s32.totalorder %s25, 0
    %p117 = por %p115, %p116
    %p118 = scmp.ne.s32.totalorder %s107, %s110
    %p119 = scmp.eq.s32.totalorder %s30, 4
    %p120 = por %p118, %p119
    %p121 = scmp.ne.s32.totalorder %s110, %s111
    %p122 = scmp.eq.s32.totalorder %s30, 0
    %p123 = por %p121, %p122
    %p124 = scmp.ne.s32.totalorder %s110, %s111
    %p125 = scmp.eq.s32.totalorder %s31, 4
    %p126 = por %p124, %p125
    %p128 = scmp.ne.s32.totalorder %s111, %s127
    %p129 = scmp.eq.s32.totalorder %s31, 0
    %p130 = por %p128, %p129
    %s131 = ssub.s32 %s33, %s40
    %p132 = scmp.eq.s32.totalorder %s131, 0
    %s134 = sadd.s32 %s133, 1
    %s135 = scalar_select %p132, %s133, %s134
    %p138 = pneg %p132
    %p139 = scmp.eq.s32.totalorder %s25, 4
    %p140 = por %p138, %p139
    %p141 = scmp.ne.s32.totalorder %s133, %s136
    %p142 = scmp.eq.s32.totalorder %s25, 0
    %p143 = por %p141, %p142
    %p144 = scmp.ne.s32.totalorder %s133, %s136
    %p145 = scmp.eq.s32.totalorder %s30, 4
    %p146 = por %p144, %p145
    %p147 = scmp.ne.s32.totalorder %s136, %s137
    %p148 = scmp.eq.s32.totalorder %s30, 0
    %p149 = por %p147, %p148
    %p150 = scmp.ne.s32.totalorder %s136, %s137
    %p151 = scmp.eq.s32.totalorder %s31, 4
    %p152 = por %p150, %p151
    %p154 = scmp.ne.s32.totalorder %s137, %s153
    %p155 = scmp.eq.s32.totalorder %s31, 0
    %p156 = por %p154, %p155
    %s157 = ssub.s32 %s33, %s40
    %s158 = ssub.s32 %s32, %s44
    %s159 = sor.u32 %s157, %s158
    %p160 = scmp.eq.s32.totalorder %s159, 0
    %s162 = sadd.s32 %s161, 1
    %s163 = scalar_select %p160, %s161, %s162
    %p166 = pneg %p160
    %p167 = scmp.eq.s32.totalorder %s25, 4
    %p168 = por %p166, %p167
    %p169 = scmp.ne.s32.totalorder %s161, %s164
    %p170 = scmp.eq.s32.totalorder %s25, 0
    %p171 = por %p169, %p170
    %p172 = scmp.ne.s32.totalorder %s161, %s164
    %p173 = scmp.eq.s32.totalorder %s30, 4
    %p174 = por %p172, %p173
    %p175 = scmp.ne.s32.totalorder %s164, %s165
    %p176 = scmp.eq.s32.totalorder %s30, 0
    %p177 = por %p175, %p176
    %p178 = scmp.ne.s32.totalorder %s164, %s165
    %p179 = scmp.eq.s32.totalorder %s31, 4
    %p180 = por %p178, %p179
    %p182 = scmp.ne.s32.totalorder %s165, %s181
    %p183 = scmp.eq.s32.totalorder %s31, 0
    %p184 = por %p182, %p183
    %p185 = scmp.le.s32.totalorder 1, %s25
    %p186 = scmp.lt.s32.totalorder %s25, 6
    %p187 = pnand %p185, %p186
    %p188 = pneg %p187
    // Predicated region
    $region9: #{moe_forward.1} parent=5 // pred_check
      _
    $region10: #{moe_forward.1} parent=5 // pred_check_branch
      %190 = sbr.rel (%p187) target = $region12
    $region11: #{moe_forward.1} parent=5 // pred_region
      %s191 = ssub.s32 %s25, 1
    $region12: #{moe_forward.1} parent=5 // pred_fallthru
      _
    %p192 = scmp.lt.s32.totalorder %s25, 5
    // Predicated region
    $region13: #{moe_forward.1} parent=5 // pred_check
      %p193 = pneg %p192
    $region14: #{moe_forward.1} parent=5 // pred_check_branch
      %195 = sbr.rel (%p193) target = $region16
    $region15: #{moe_forward.1} parent=5 // pred_region
      // Predicated region
      $region17: #{moe_forward.1} parent=15 // pred_check
        %p196 = pneg %p57
      $region18: #{moe_forward.1} parent=15 // pred_check_branch
        %198 = sbr.rel (%p196) target = $region20
      $region19: #{moe_forward.1} parent=15 // pred_region
        %s199 = smul.u32 16, %s33
        %p200 = scmp.lt.s32.totalorder %s199, 79
        %s201 = scalar_select %p200, %s199, 79
        %s202 = smul.addr %s201, 4
        %s203 = scalar_lea.vmem %s2, %s202
        %s204 = smul.u32 16, %s33
      $region20: #{moe_forward.1} parent=15 // pred_fallthru
        _
      // Predicated region
      $region21: #{moe_forward.1} parent=15 // pred_check
        %p205 = pneg %p87
      $region22: #{moe_forward.1} parent=15 // pred_check_branch
        %207 = sbr.rel (%p205) target = $region24
      $region23: #{moe_forward.1} parent=15 // pred_region
        %s208 = sld [smem:[#allocation3 + %s33]]
        %s209 = smul.u32 16, %s32
        %p210 = scmp.lt.s32.totalorder %s208, 3
        %s211 = scalar_select %p210, %s208, 3
        %p212 = scmp.lt.s32.totalorder %s209, 15
        %s213 = scalar_select %p212, %s209, 15
        %s214 = smul.addr %s211, 16
        %s215 = sadd.s32 %s213, %s214
        %s216 = smul.addr %s215, 4
        %s217 = scalar_lea.vmem %s3, %s216
        %s218 = sld [smem:[#allocation3 + %s33]]
        %s219 = smul.u32 16, %s32
      $region24: #{moe_forward.1} parent=15 // pred_fallthru
        _
      // Predicated region
      $region25: #{moe_forward.1} parent=15 // pred_check
        %p220 = pneg %p117
      $region26: #{moe_forward.1} parent=15 // pred_check_branch
        %222 = sbr.rel (%p220) target = $region28
      $region27: #{moe_forward.1} parent=15 // pred_region
        %s223 = sld [smem:[#allocation3 + %s33]]
        %p224 = scmp.lt.s32.totalorder %s223, 3
        %s225 = scalar_select %p224, %s223, 3
        %p226 = scmp.lt.s32.totalorder %s32, 0
        %s227 = scalar_select %p226, %s32, 0
        %s228 = sadd.s32 %s227, %s225
        %s229 = scalar_lea.vmem %s4, %s228
        %s230 = sld [smem:[#allocation3 + %s33]]
      $region28: #{moe_forward.1} parent=15 // pred_fallthru
        _
      // Predicated region
      $region29: #{moe_forward.1} parent=15 // pred_check
        %p231 = pneg %p143
      $region30: #{moe_forward.1} parent=15 // pred_check_branch
        %233 = sbr.rel (%p231) target = $region32
      $region31: #{moe_forward.1} parent=15 // pred_region
        %s234 = smul.u32 16, %s33
        %p235 = scmp.lt.s32.totalorder %s234, 79
        %s236 = scalar_select %p235, %s234, 79
        %s237 = smul.addr %s236, 8
        %s238 = scalar_lea.vmem %s5, %s237
        %s239 = smul.u32 16, %s33
      $region32: #{moe_forward.1} parent=15 // pred_fallthru
        _
    $region16: #{moe_forward.1} parent=5 // pred_fallthru
      _
    %p240 = scmp.le.s32.totalorder 1, %s25
    %p241 = scmp.lt.s32.totalorder %s25, 6
    %p242 = pnand %p240, %p241
    %p243 = pneg %p242
    // Predicated region
    $region33: #{moe_forward.1} parent=5 // pred_check
      _
    $region34: #{moe_forward.1} parent=5 // pred_check_branch
      %245 = sbr.rel (%p242) target = $region36
    $region35: #{moe_forward.1} parent=5 // pred_region
      %s246 = ssub.s32 %s25, 1
      %s247 = smul.u32 16, %s35
      %p248 = scmp.lt.s32.totalorder %s247, 79
      %s249 = scalar_select %p248, %s247, 79
      %s250 = smul.addr %s249, 4
      %s251 = scalar_lea.vmem %s2, %s250
      %p252 = pneg %p63
      %p253 = pneg %p60
      %s254 = sld [smem:[#allocation3 + %s35]]
      %s255 = smul.u32 16, %s34
      %p256 = scmp.lt.s32.totalorder %s254, 3
      %s257 = scalar_select %p256, %s254, 3
      %p258 = scmp.lt.s32.totalorder %s255, 15
      %s259 = scalar_select %p258, %s255, 15
      %s260 = smul.addr %s257, 16
      %s261 = sadd.s32 %s259, %s260
      %s262 = smul.addr %s261, 4
      %s263 = scalar_lea.vmem %s3, %s262
      %p264 = pneg %p93
      %p265 = pneg %p90
      %s266 = sld [smem:[#allocation3 + %s35]]
      %p267 = scmp.lt.s32.totalorder %s266, 3
      %s268 = scalar_select %p267, %s266, 3
      %p269 = scmp.lt.s32.totalorder %s34, 0
      %s270 = scalar_select %p269, %s34, 0
      %s271 = sadd.s32 %s270, %s268
      %s272 = scalar_lea.vmem %s4, %s271
      %p273 = pneg %p123
      %p274 = pneg %p120
      %s275 = smul.u32 16, %s35
      %p276 = scmp.lt.s32.totalorder %s275, 79
      %s277 = scalar_select %p276, %s275, 79
      %s278 = smul.addr %s277, 8
      %s279 = scalar_lea.vmem %s5, %s278
      %p280 = pneg %p149
      %p281 = pneg %p146
      %p282 = pneg %p177
      %p283 = pneg %p174
      %s284 = smul.u32 16, %s35
      %p285 = scmp.lt.s32.totalorder %s284, 79
      %s286 = scalar_select %p285, %s284, 79
      %p287 = scmp.lt.s32.totalorder %s34, 0
      %s288 = scalar_select %p287, %s34, 0
      %s289 = sadd.s32 %s288, %s286
      %s290 = smul.addr %s289, 4
      %s291 = scalar_lea.vmem %s6, %s290
      %s292 = smul.u32 16, %s35
      %p293 = scmp.lt.s32.totalorder %s292, 79
      %s294 = scalar_select %p293, %s292, 79
      %s295 = smul.addr %s294, 4
      %s296 = scalar_lea.vmem %s2, %s295
      %s297 = smul.u32 16, %s35
      %s298 = sld [smem:[#allocation3 + %s35]]
      %s299 = smul.u32 16, %s34
      %p300 = scmp.lt.s32.totalorder %s298, 3
      %s301 = scalar_select %p300, %s298, 3
      %p302 = scmp.lt.s32.totalorder %s299, 15
      %s303 = scalar_select %p302, %s299, 15
      %s304 = smul.addr %s301, 16
      %s305 = sadd.s32 %s303, %s304
      %s306 = smul.addr %s305, 4
      %s307 = scalar_lea.vmem %s3, %s306
      %s308 = sld [smem:[#allocation3 + %s35]]
      %s309 = smul.u32 16, %s34
      %s310 = sld [smem:[#allocation3 + %s35]]
      %p311 = scmp.lt.s32.totalorder %s310, 3
      %s312 = scalar_select %p311, %s310, 3
      %p313 = scmp.lt.s32.totalorder %s34, 0
      %s314 = scalar_select %p313, %s34, 0
      %s315 = sadd.s32 %s314, %s312
      %s316 = scalar_lea.vmem %s4, %s315
      %s317 = sld [smem:[#allocation3 + %s35]]
      %s318 = smul.u32 16, %s35
      %p319 = scmp.lt.s32.totalorder %s318, 79
      %s320 = scalar_select %p319, %s318, 79
      %s321 = smul.addr %s320, 8
      %s322 = scalar_lea.vmem %s5, %s321
      %s323 = smul.u32 16, %s35
      %s324 = smul.u32 16, %s35
      %p325 = scmp.lt.s32.totalorder %s324, 79
      %s326 = scalar_select %p325, %s324, 79
      %p327 = scmp.lt.s32.totalorder %s34, 0
      %s328 = scalar_select %p327, %s34, 0
      %s329 = sadd.s32 %s328, %s326
      %s330 = smul.addr %s329, 4
      %s331 = scalar_lea.vmem %s6, %s330
      %s332 = smul.u32 16, %s35
      %s334 = sld [smem:[#allocation4 + %s35]]
      %p335 = scmp.gt.s32.totalorder %s334, 0
      // Predicated region
      $region37: #{moe_forward.1} parent=35 // pred_check
        %p336 = pneg %p335
      $region38: #{moe_forward.1} parent=35 // pred_check_branch
        %338 = sbr.rel (%p336) target = $region40
      $region39: #{moe_forward.1} parent=35 // pred_region
        %v339 = vld [vmem:[%s296] sm:$0xf]
        %v340 = vld [vmem:[%s296 + $0x4] sm:$0xf]
        %v341 = vld [vmem:[%s296 + $0x8] sm:$0xf]
        %v342 = vld [vmem:[%s296 + $0xc] sm:$0xf]
        %v343 = vld [vmem:[%s296 + $0x10] sm:$0xf]
        %v344 = vld [vmem:[%s296 + $0x14] sm:$0xf]
        %v345 = vld [vmem:[%s296 + $0x18] sm:$0xf]
        %v346 = vld [vmem:[%s296 + $0x1c] sm:$0xf]
        %v347 = vld [vmem:[%s296 + $0x20] sm:$0xf]
        %v348 = vld [vmem:[%s296 + $0x24] sm:$0xf]
        %v349 = vld [vmem:[%s296 + $0x28] sm:$0xf]
        %v350 = vld [vmem:[%s296 + $0x2c] sm:$0xf]
        %v351 = vld [vmem:[%s296 + $0x30] sm:$0xf]
        %v352 = vld [vmem:[%s296 + $0x34] sm:$0xf]
        %v353 = vld [vmem:[%s296 + $0x38] sm:$0xf]
        %v354 = vld [vmem:[%s296 + $0x3c] sm:$0xf]
        %v355 = vld [vmem:[%s307] sm:$0xf]
        %v356 = vld [vmem:[%s307 + $0x4] sm:$0xf]
        %v357 = vld [vmem:[%s307 + $0x8] sm:$0xf]
        %v358 = vld [vmem:[%s307 + $0xc] sm:$0xf]
        %v359 = vld [vmem:[%s307 + $0x10] sm:$0xf]
        %v360 = vld [vmem:[%s307 + $0x14] sm:$0xf]
        %v361 = vld [vmem:[%s307 + $0x18] sm:$0xf]
        %v362 = vld [vmem:[%s307 + $0x1c] sm:$0xf]
        %v363 = vld [vmem:[%s307 + $0x20] sm:$0xf]
        %v364 = vld [vmem:[%s307 + $0x24] sm:$0xf]
        %v365 = vld [vmem:[%s307 + $0x28] sm:$0xf]
        %v366 = vld [vmem:[%s307 + $0x2c] sm:$0xf]
        %v367 = vld [vmem:[%s307 + $0x30] sm:$0xf]
        %v368 = vld [vmem:[%s307 + $0x34] sm:$0xf]
        %v369 = vld [vmem:[%s307 + $0x38] sm:$0xf]
        %v370 = vld [vmem:[%s307 + $0x3c] sm:$0xf]
        %v371 = vld [vmem:[%s322] sm:$0xff]
        %v372 = vld [vmem:[%s322 + $0x8] sm:$0xff]
        %v373 = vld [vmem:[%s322 + $0x10] sm:$0xff]
        %v374 = vld [vmem:[%s322 + $0x18] sm:$0xff]
        %v375 = vld [vmem:[%s322 + $0x20] sm:$0xff]
        %v376 = vld [vmem:[%s322 + $0x28] sm:$0xff]
        %v377 = vld [vmem:[%s322 + $0x30] sm:$0xff]
        %v378 = vld [vmem:[%s322 + $0x38] sm:$0xff]
        %v379 = vld [vmem:[%s322 + $0x40] sm:$0xff]
        %v380 = vld [vmem:[%s322 + $0x48] sm:$0xff]
        %v381 = vld [vmem:[%s322 + $0x50] sm:$0xff]
        %v382 = vld [vmem:[%s322 + $0x58] sm:$0xff]
        %v383 = vld [vmem:[%s322 + $0x60] sm:$0xff]
        %v384 = vld [vmem:[%s322 + $0x68] sm:$0xff]
        %v385 = vld [vmem:[%s322 + $0x70] sm:$0xff]
        %v386 = vld [vmem:[%s322 + $0x78] sm:$0xff]
        %v387 = vld [vmem:[%s316] sm:$0x1]
        %v389 = vperm.slane %v387, 0
        %v407 = vunpack.c.l.b16 %v339
        %v408 = vunpack.c.l.b16 %v340
        %v409 = vunpack.c.l.b16 %v341
        %v410 = vunpack.c.l.b16 %v342
        %v411 = vunpack.c.l.b16 %v343
        %v412 = vunpack.c.l.b16 %v344
        %v413 = vunpack.c.l.b16 %v345
        %v414 = vunpack.c.l.b16 %v346
        %v415 = vunpack.c.l.b16 %v347
        %v416 = vunpack.c.l.b16 %v348
        %v417 = vunpack.c.l.b16 %v349
        %v418 = vunpack.c.l.b16 %v350
        %v419 = vunpack.c.l.b16 %v351
        %v420 = vunpack.c.l.b16 %v352
        %v421 = vunpack.c.l.b16 %v353
        %v422 = vunpack.c.l.b16 %v354
        %v423 = vpack.c.b16 %v408, %v407
        %v424 = vpack.c.b16 %v410, %v409
        %v425 = vpack.c.b16 %v412, %v411
        %v426 = vpack.c.b16 %v414, %v413
        %v427 = vpack.c.b16 %v416, %v415
        %v428 = vpack.c.b16 %v418, %v417
        %v429 = vpack.c.b16 %v420, %v419
        %v430 = vpack.c.b16 %v422, %v421
        %v455 = vunpack.c.l.b16 %v355
        %v456 = vunpack.c.l.b16 %v356
        %v457 = vunpack.c.l.b16 %v357
        %v458 = vunpack.c.l.b16 %v358
        %v459 = vunpack.c.l.b16 %v359
        %v460 = vunpack.c.l.b16 %v360
        %v461 = vunpack.c.l.b16 %v361
        %v462 = vunpack.c.l.b16 %v362
        %v463 = vunpack.c.l.b16 %v363
        %v464 = vunpack.c.l.b16 %v364
        %v465 = vunpack.c.l.b16 %v365
        %v466 = vunpack.c.l.b16 %v366
        %v467 = vunpack.c.l.b16 %v367
        %v468 = vunpack.c.l.b16 %v368
        %v469 = vunpack.c.l.b16 %v369
        %v470 = vunpack.c.l.b16 %v370
        %v471 = vpack.c.b16 %v456, %v455
        %v472 = vpack.c.b16 %v458, %v457
        %v473 = vpack.c.b16 %v460, %v459
        %v474 = vpack.c.b16 %v462, %v461
        %v475 = vpack.c.b16 %v464, %v463
        %v476 = vpack.c.b16 %v466, %v465
        %v477 = vpack.c.b16 %v468, %v467
        %v478 = vpack.c.b16 %v470, %v469
        %487 = vmatpush.bf16.xpose.msra.mxu0 %v478
        %488 = vmatpush.bf16.xpose.msra.mxu0 %v477
        %489 = vmatpush.bf16.xpose.msra.mxu0 %v476
        %490 = vmatpush.bf16.xpose.msra.mxu0 %v475
        %491 = vmatpush.bf16.xpose.msra.mxu0 %v474
        %492 = vmatpush.bf16.xpose.msra.mxu0 %v473
        %493 = vmatpush.bf16.xpose.msra.mxu0 %v472
        %494 = vmatpush.bf16.xpose.msra.mxu0 %v471
        %495 = vmatmul.bf16.gmra.mxu0 %v423
        %v496 = vpop.f32.mrf.mxu0
        %v497 = vadd.f32 %v389, %v496
        %v498 = vpop.f32.mrf.mxu0
        %v499 = vadd.f32 %v389, %v498
        %500 = vmatmul.bf16.gmra.mxu0 %v424
        %v501 = vpop.f32.mrf.mxu0
        %v502 = vadd.f32 %v389, %v501
        %v503 = vpop.f32.mrf.mxu0
        %v504 = vadd.f32 %v389, %v503
        %505 = vmatmul.bf16.gmra.mxu0 %v425
        %v506 = vpop.f32.mrf.mxu0
        %v507 = vadd.f32 %v389, %v506
        %v508 = vpop.f32.mrf.mxu0
        %v509 = vadd.f32 %v389, %v508
        %510 = vmatmul.bf16.gmra.mxu0 %v426
        %v511 = vpop.f32.mrf.mxu0
        %v512 = vadd.f32 %v389, %v511
        %v513 = vpop.f32.mrf.mxu0
        %v514 = vadd.f32 %v389, %v513
        %515 = vmatmul.bf16.gmra.mxu0 %v427
        %v516 = vpop.f32.mrf.mxu0
        %v517 = vadd.f32 %v389, %v516
        %v518 = vpop.f32.mrf.mxu0
        %v519 = vadd.f32 %v389, %v518
        %520 = vmatmul.bf16.gmra.mxu0 %v428
        %v521 = vpop.f32.mrf.mxu0
        %v522 = vadd.f32 %v389, %v521
        %v523 = vpop.f32.mrf.mxu0
        %v524 = vadd.f32 %v389, %v523
        %525 = vmatmul.bf16.gmra.mxu0 %v429
        %v526 = vpop.f32.mrf.mxu0
        %v527 = vadd.f32 %v389, %v526
        %v528 = vpop.f32.mrf.mxu0
        %v529 = vadd.f32 %v389, %v528
        %530 = vmatmul.bf16.gmra.mxu0 %v430
        %v531 = vpop.f32.mrf.mxu0
        %v532 = vadd.f32 %v389, %v531
        %v533 = vpop.f32.mrf.mxu0
        %v534 = vadd.f32 %v389, %v533
        %535 = vdwg.mxu0
        %537 = vset.pattern.permute.xlu0 0
        %538 = vperm.xlu0 %537, %v371
        %v539 = vpop.permute.xlu0 %538
        %542 = vset.pattern.permute.xlu0 0
        %543 = vperm.xlu0 %542, %v372
        %v544 = vpop.permute.xlu0 %543
        %547 = vset.pattern.permute.xlu0 0
        %548 = vperm.xlu0 %547, %v373
        %v549 = vpop.permute.xlu0 %548
        %552 = vset.pattern.permute.xlu0 0
        %553 = vperm.xlu0 %552, %v374
        %v554 = vpop.permute.xlu0 %553
        %557 = vset.pattern.permute.xlu0 0
        %558 = vperm.xlu0 %557, %v375
        %v559 = vpop.permute.xlu0 %558
        %562 = vset.pattern.permute.xlu0 0
        %563 = vperm.xlu0 %562, %v376
        %v564 = vpop.permute.xlu0 %563
        %567 = vset.pattern.permute.xlu0 0
        %568 = vperm.xlu0 %567, %v377
        %v569 = vpop.permute.xlu0 %568
        %572 = vset.pattern.permute.xlu0 0
        %573 = vperm.xlu0 %572, %v378
        %v574 = vpop.permute.xlu0 %573
        %577 = vset.pattern.permute.xlu0 0
        %578 = vperm.xlu0 %577, %v379
        %v579 = vpop.permute.xlu0 %578
        %582 = vset.pattern.permute.xlu0 0
        %583 = vperm.xlu0 %582, %v380
        %v584 = vpop.permute.xlu0 %583
        %587 = vset.pattern.permute.xlu0 0
        %588 = vperm.xlu0 %587, %v381
        %v589 = vpop.permute.xlu0 %588
        %592 = vset.pattern.permute.xlu0 0
        %593 = vperm.xlu0 %592, %v382
        %v594 = vpop.permute.xlu0 %593
        %597 = vset.pattern.permute.xlu0 0
        %598 = vperm.xlu0 %597, %v383
        %v599 = vpop.permute.xlu0 %598
        %602 = vset.pattern.permute.xlu0 0
        %603 = vperm.xlu0 %602, %v384
        %v604 = vpop.permute.xlu0 %603
        %607 = vset.pattern.permute.xlu0 0
        %608 = vperm.xlu0 %607, %v385
        %v609 = vpop.permute.xlu0 %608
        %612 = vset.pattern.permute.xlu0 0
        %613 = vperm.xlu0 %612, %v386
        %v614 = vpop.permute.xlu0 %613
        %v616 = vmul.f32 %v539, %v497
        %v617 = vmul.f32 %v544, %v499
        %v618 = vmul.f32 %v549, %v502
        %v619 = vmul.f32 %v554, %v504
        %v620 = vmul.f32 %v559, %v507
        %v621 = vmul.f32 %v564, %v509
        %v622 = vmul.f32 %v569, %v512
        %v623 = vmul.f32 %v574, %v514
        %v624 = vmul.f32 %v579, %v517
        %v625 = vmul.f32 %v584, %v519
        %v626 = vmul.f32 %v589, %v522
        %v627 = vmul.f32 %v594, %v524
        %v628 = vmul.f32 %v599, %v527
        %v629 = vmul.f32 %v604, %v529
        %v630 = vmul.f32 %v609, %v532
        %v631 = vmul.f32 %v614, %v534
        %v632 = vpack.c.bf16 %v616, %v616
        %v633 = vpack.c.bf16 %v617, %v617
        %v634 = vpack.c.bf16 %v618, %v618
        %v635 = vpack.c.bf16 %v619, %v619
        %v636 = vpack.c.bf16 %v620, %v620
        %v637 = vpack.c.bf16 %v621, %v621
        %v638 = vpack.c.bf16 %v622, %v622
        %v639 = vpack.c.bf16 %v623, %v623
        %v640 = vpack.c.bf16 %v624, %v624
        %v641 = vpack.c.bf16 %v625, %v625
        %v642 = vpack.c.bf16 %v626, %v626
        %v643 = vpack.c.bf16 %v627, %v627
        %v644 = vpack.c.bf16 %v628, %v628
        %v645 = vpack.c.bf16 %v629, %v629
        %v646 = vpack.c.bf16 %v630, %v630
        %v647 = vpack.c.bf16 %v631, %v631
        %648 = vst [vmem:[%s331] sm:$0xf] %v632
        %649 = vst [vmem:[%s331 + $0x4] sm:$0xf] %v633
        %650 = vst [vmem:[%s331 + $0x8] sm:$0xf] %v634
        %651 = vst [vmem:[%s331 + $0xc] sm:$0xf] %v635
        %652 = vst [vmem:[%s331 + $0x10] sm:$0xf] %v636
        %653 = vst [vmem:[%s331 + $0x14] sm:$0xf] %v637
        %654 = vst [vmem:[%s331 + $0x18] sm:$0xf] %v638
        %655 = vst [vmem:[%s331 + $0x1c] sm:$0xf] %v639
        %656 = vst [vmem:[%s331 + $0x20] sm:$0xf] %v640
        %657 = vst [vmem:[%s331 + $0x24] sm:$0xf] %v641
        %658 = vst [vmem:[%s331 + $0x28] sm:$0xf] %v642
        %659 = vst [vmem:[%s331 + $0x2c] sm:$0xf] %v643
        %660 = vst [vmem:[%s331 + $0x30] sm:$0xf] %v644
        %661 = vst [vmem:[%s331 + $0x34] sm:$0xf] %v645
        %662 = vst [vmem:[%s331 + $0x38] sm:$0xf] %v646
        %663 = vst [vmem:[%s331 + $0x3c] sm:$0xf] %v647
      $region40: #{moe_forward.1} parent=35 // pred_fallthru
        _
      %s664 = sld [smem:[#allocation4 + %s35]]
      %p665 = scmp.eq.s32.totalorder %s664, 0
      // Predicated region
      $region41: #{moe_forward.1} parent=35 // pred_check
        %p666 = pneg %p665
      $region42: #{moe_forward.1} parent=35 // pred_check_branch
        %668 = sbr.rel (%p666) target = $region44
      $region43: #{moe_forward.1} parent=35 // pred_region
        %669 = vst [vmem:[%s331] sm:$0xf] 0
        %670 = vst [vmem:[%s331 + $0x4] sm:$0xf] 0
        %671 = vst [vmem:[%s331 + $0x8] sm:$0xf] 0
        %672 = vst [vmem:[%s331 + $0xc] sm:$0xf] 0
        %673 = vst [vmem:[%s331 + $0x10] sm:$0xf] 0
        %674 = vst [vmem:[%s331 + $0x14] sm:$0xf] 0
        %675 = vst [vmem:[%s331 + $0x18] sm:$0xf] 0
        %676 = vst [vmem:[%s331 + $0x1c] sm:$0xf] 0
        %677 = vst [vmem:[%s331 + $0x20] sm:$0xf] 0
        %678 = vst [vmem:[%s331 + $0x24] sm:$0xf] 0
        %679 = vst [vmem:[%s331 + $0x28] sm:$0xf] 0
        %680 = vst [vmem:[%s331 + $0x2c] sm:$0xf] 0
        %681 = vst [vmem:[%s331 + $0x30] sm:$0xf] 0
        %682 = vst [vmem:[%s331 + $0x34] sm:$0xf] 0
        %683 = vst [vmem:[%s331 + $0x38] sm:$0xf] 0
        %684 = vst [vmem:[%s331 + $0x3c] sm:$0xf] 0
      $region44: #{moe_forward.1} parent=35 // pred_fallthru
        _
      %s685 = smul.u32 16, %s35
      %p686 = scmp.lt.s32.totalorder %s685, 79
      %s687 = scalar_select %p686, %s685, 79
      %p688 = scmp.lt.s32.totalorder %s34, 0
      %s689 = scalar_select %p688, %s34, 0
      %s690 = sadd.s32 %s689, %s687
      %s691 = smul.addr %s690, 4
      %s692 = scalar_lea.vmem %s6, %s691
      // Predicated region
      $region45: #{moe_forward.1} parent=35 // pred_check
        %p693 = pneg %p174
      $region46: #{moe_forward.1} parent=35 // pred_check_branch
        %695 = sbr.rel (%p693) target = $region48
      $region47: #{moe_forward.1} parent=35 // pred_region
        %s696 = smul.u32 16, %s35
      $region48: #{moe_forward.1} parent=35 // pred_fallthru
        _
    $region36: #{moe_forward.1} parent=5 // pred_fallthru
      _
    %p697 = scmp.le.s32.totalorder 2, %s25
    // Predicated region
    $region49: #{moe_forward.1} parent=5 // pred_check
      %p698 = pneg %p697
    $region50: #{moe_forward.1} parent=5 // pred_check_branch
      %700 = sbr.rel (%p698) target = $region52
    $region51: #{moe_forward.1} parent=5 // pred_region
      %s701 = ssub.s32 %s25, 2
      // Predicated region
      $region53: #{moe_forward.1} parent=51 // pred_check
        %p702 = pneg %p180
      $region54: #{moe_forward.1} parent=51 // pred_check_branch
        %704 = sbr.rel (%p702) target = $region56
      $region55: #{moe_forward.1} parent=51 // pred_region
        %s705 = smul.u32 16, %s37
        %p706 = scmp.lt.s32.totalorder %s705, 79
        %s707 = scalar_select %p706, %s705, 79
        %p708 = scmp.lt.s32.totalorder %s36, 0
        %s709 = scalar_select %p708, %s36, 0
        %s710 = sadd.s32 %s709, %s707
        %s711 = smul.addr %s710, 4
        %s712 = scalar_lea.vmem %s6, %s711
      $region56: #{moe_forward.1} parent=51 // pred_fallthru
        _
    $region52: #{moe_forward.1} parent=5 // pred_fallthru
      _
  $region6: #{moe_forward.1} parent=0 // loop_footer
    %s29 = sadd.s32 1, %s25
  $region7: #{moe_forward.1} parent=0 // loop_footer_branch
    %24 = sbr.rel target = $region3
  $region8: #{moe_forward.1} parent=0 // loop_exit
    _

</llo_original>
